<compile_context>
chip_gen: v7x
topology: tpu7x:2x2x1
jax: 0.10.0
libtpu: 0.0.40
codegen_flags: <defaults>
</compile_context>

<pallas_src>
import functools

import jax
import jax.numpy as jnp
from jax.experimental import pallas as pl
from jax.experimental.pallas import tpu as pltpu

_SUBLANE = 8


def _round_up(n, m):
    return pl.cdiv(n, m) * m


def _choose_row_tile(n, tile_n):
    """Row tile: multiple of 8, clamped to the batch, even step count."""
    tm = min(_round_up(tile_n, _SUBLANE), _round_up(n, _SUBLANE))
    steps = pl.cdiv(n, tm)
    if steps > 1 and steps % 2 == 1:
        # Bump to the next (even) step count so v7x's two TensorCores split
        # the "parallel" row-tile axis evenly; harmless on v5e/v6e.
        tm = _round_up(pl.cdiv(n, steps + 1), _SUBLANE)
    return tm


def _ocfc_kernel(x_ref, w_ref, v_ref, o_ref):
    # First matmul on the MXU, f32 accumulation.
    h = jnp.dot(x_ref[...], w_ref[...], preferred_element_type=jnp.float32)
    # Sigmoid in f32 (EUP); required on v5e (no bf16 VPU/EUP), free elsewhere.
    s = jax.nn.sigmoid(h)
    # Second matmul; cast the activation to V's dtype only at the MXU input.
    o_ref[...] = jnp.dot(
        s.astype(v_ref.dtype), v_ref[...],
        preferred_element_type=jnp.float32).astype(o_ref.dtype)


@functools.partial(jax.jit, static_argnames=("tile_n",))
def ocfc_forward(x, w, v, *, tile_n=8192):
    """sigmoid(x @ w) @ v as a single fused, row-tiled Pallas kernel."""
    n, x_dim = x.shape
    x_dim_w, w_dim = w.shape
    w_dim_v, v_dim = v.shape
    assert x_dim_w == x_dim and w_dim_v == w_dim

    out_dtype = x.dtype
    tm = _choose_row_tile(n, tile_n)
    grid = (pl.cdiv(n, tm),)

    cost = pl.CostEstimate(
        flops=2 * n * (x_dim * w_dim + w_dim * v_dim),
        transcendentals=n * w_dim,
        bytes_accessed=(n * x_dim * x.dtype.itemsize
                        + x_dim * w_dim * w.dtype.itemsize
                        + w_dim * v_dim * v.dtype.itemsize
                        + n * v_dim * jnp.dtype(out_dtype).itemsize),
    )

    return pl.pallas_call(
        _ocfc_kernel,
        out_shape=jax.ShapeDtypeStruct((n, v_dim), out_dtype),
        grid=grid,
        in_specs=[
            # x: streamed per row-tile (double-buffered by the pipeline).
            pl.BlockSpec((tm, x_dim), lambda i: (i, 0)),
            # w, V: full arrays, fetched once and VMEM-resident across steps.
            pl.BlockSpec((x_dim, w_dim), lambda i: (0, 0)),
            pl.BlockSpec((w_dim, v_dim), lambda i: (0, 0)),
        ],
        # Last dim == full array extent (v_dim): legal and lane-narrow; the
        # ragged final row tile (n % tm) is masked by Pallas on writeback.
        out_specs=pl.BlockSpec((tm, v_dim), lambda i: (i, 0)),
        compiler_params=pltpu.CompilerParams(
            dimension_semantics=("parallel",)),
        cost_estimate=cost,
    )(x, w, v)


if __name__ == "__main__":
    # Small shapes consistent with the module's config:
    #   batch N = 8, x_dim = 32, w_dim = 16, V_dim = 4
    N, X_DIM, W_DIM, V_DIM = 8, 32, 16, 4

    key = jax.random.PRNGKey(0)
    kx, kw, kv, kx2 = jax.random.split(key, 4)

    x = jax.random.normal(kx, (N, X_DIM), dtype=jnp.float32)
    # nn.Parameter(torch.rand(...)) -> uniform [0, 1)
    w = jax.random.uniform(kw, (X_DIM, W_DIM), dtype=jnp.float32)
    v = jax.random.uniform(kv, (W_DIM, V_DIM), dtype=jnp.float32)

    def ref_fn(xx):
        return jnp.matmul(jax.nn.sigmoid(jnp.matmul(xx, w)), v)

    # 1) Small batch: single grid step, narrow (4-wide) unpadded output.
    out = jax.block_until_ready(ocfc_forward(x, w, v))
    assert out.shape == (N, V_DIM)
    assert jnp.allclose(out, ref_fn(x), atol=1e-5, rtol=1e-5)

    # 2) Larger batch with a remainder: exercises the ragged final tile and
    #    the even-step heuristic (N=700, tile_n=256 -> tm=176, grid of 4).
    N2 = 700
    x2 = jax.random.normal(kx2, (N2, X_DIM), dtype=jnp.float32)
    out2 = jax.block_until_ready(ocfc_forward(x2, w, v, tile_n=256))
    assert out2.shape == (N2, V_DIM)
    assert jnp.allclose(out2, ref_fn(x2), atol=1e-5, rtol=1e-5)

    # 3) Default large tile on the bigger batch (single step, tm clamped).
    out3 = jax.block_until_ready(ocfc_forward(x2, w, v))
    assert jnp.allclose(out3, ref_fn(x2), atol=1e-5, rtol=1e-5)

    print("KERNEL_OK")
</pallas_src>

<mosaic_0001>
module attributes {stable_mosaic.version = 11 : i64} {
  func.func @_ocfc_kernel(%arg0: i32, %arg1: memref<8x32xf32, #tpu.memory_space<vmem>>, %arg2: memref<32x16xf32, #tpu.memory_space<vmem>>, %arg3: memref<16x4xf32, #tpu.memory_space<vmem>>, %arg4: memref<8x4xf32, #tpu.memory_space<vmem>>) attributes {dimension_semantics = [#tpu.dimension_semantics<parallel>], iteration_bounds = array<i64: 1>, scalar_prefetch = 0 : i64, scratch_operands = 0 : i64, tpu.core_type = #tpu.core_type<tc>, window_params = [{transform_indices = @transform_0, window_bounds = array<i64: 8, 32>}, {pipeline_mode = #tpu.pipeline_mode<synchronous>, transform_indices = @transform_1, window_bounds = array<i64: 32, 16>}, {pipeline_mode = #tpu.pipeline_mode<synchronous>, transform_indices = @transform_2, window_bounds = array<i64: 16, 4>}, {transform_indices = @transform_3, window_bounds = array<i64: 8, 4>}]} {
    %c0 = arith.constant 0 : index
    %c0_0 = arith.constant 0 : index
    %0 = vector.load %arg1[%c0, %c0_0] : memref<8x32xf32, #tpu.memory_space<vmem>>, vector<8x32xf32>
    %c0_1 = arith.constant 0 : index
    %c0_2 = arith.constant 0 : index
    %1 = vector.load %arg2[%c0_1, %c0_2] : memref<32x16xf32, #tpu.memory_space<vmem>>, vector<32x16xf32>
    %cst = arith.constant dense<0.000000e+00> : vector<8x16xf32>
    %2 = tpu.matmul %0, %1, %cst {dimension_numbers = #tpu.dot_dimension_numbers<[1], [0], [0], [1], [0, 0, 1, 1], [], []>} : vector<8x32xf32>, vector<32x16xf32>, vector<8x16xf32> -> vector<8x16xf32>
    %3 = arith.negf %2 : vector<8x16xf32>
    %4 = math.exp %3 : vector<8x16xf32>
    %cst_3 = arith.constant 1.000000e+00 : f32
    %5 = vector.broadcast %cst_3 : f32 to vector<8x16xf32>
    %6 = arith.addf %5, %4 : vector<8x16xf32>
    %7 = arith.divf %5, %6 : vector<8x16xf32>
    %c0_4 = arith.constant 0 : index
    %c0_5 = arith.constant 0 : index
    %8 = vector.load %arg3[%c0_4, %c0_5] : memref<16x4xf32, #tpu.memory_space<vmem>>, vector<16x4xf32>
    %cst_6 = arith.constant dense<0.000000e+00> : vector<8x4xf32>
    %9 = tpu.matmul %7, %8, %cst_6 {dimension_numbers = #tpu.dot_dimension_numbers<[1], [0], [0], [1], [0, 0, 1, 1], [], []>} : vector<8x16xf32>, vector<16x4xf32>, vector<8x4xf32> -> vector<8x4xf32>
    %c0_7 = arith.constant 0 : index
    %c0_8 = arith.constant 0 : index
    %10 = vector.load %arg4[%c0_7, %c0_8] : memref<8x4xf32, #tpu.memory_space<vmem>>, vector<8x4xf32>
    tpu.vector_store %arg4[%c0_7, %c0_8], %9 {strides = array<i32>} : memref<8x4xf32, #tpu.memory_space<vmem>>, vector<8x4xf32>,
    return
  }
  func.func @transform_0(%arg0: i32) -> (i32, i32) {
    %c0_i32 = arith.constant 0 : i32
    %c0_i32_0 = arith.constant 0 : i32
    return %arg0, %c0_i32 : i32, i32
  }
  func.func @transform_1(%arg0: i32) -> (i32, i32) {
    %c0_i32 = arith.constant 0 : i32
    %c0_i32_0 = arith.constant 0 : i32
    %c0_i32_1 = arith.constant 0 : i32
    return %c0_i32, %c0_i32_0 : i32, i32
  }
  func.func @transform_2(%arg0: i32) -> (i32, i32) {
    %c0_i32 = arith.constant 0 : i32
    %c0_i32_0 = arith.constant 0 : i32
    %c0_i32_1 = arith.constant 0 : i32
    return %c0_i32, %c0_i32_0 : i32, i32
  }
  func.func @transform_3(%arg0: i32) -> (i32, i32) {
    %c0_i32 = arith.constant 0 : i32
    %c0_i32_0 = arith.constant 0 : i32
    return %arg0, %c0_i32 : i32, i32
  }
}

</mosaic_0001>

<llo_original>
// kernel: ocfc_forward.1
$region0: #{ocfc_forward.1}
  #allocation0 [shape = 'u32[]', space=smem, size = 0x4, offset = 0x4, fixed_abs, tag = 'smem constant byte address 0x4 - core index']
  #allocation1 [shape = 'u32[144,128]{1,0:T(1,128)}', space=vmem, size = 0x12000, scoped, tag = 'internal scratch']
  %s0 = inlined_call_operand.vmem [shape: f32[8,32], index: 0, kind: input, shape index: {}]
  %s1 = inlined_call_operand.vmem [shape: f32[32,16], index: 1, kind: input, shape index: {}]
  %s2 = inlined_call_operand.vmem [shape: f32[16,4], index: 2, kind: input, shape index: {}]
  %s3 = inlined_call_operand.vmem [shape: f32[8,4], index: 3, kind: output, shape index: {}]
  %s4 = sld [smem:[#allocation0]]
  $region22: #{ocfc_forward.1} parent=0
    _
  %s6 = ssub.s32 1, %s4
  %s7 = scalar_select 0, %s6, %s4
  // Predicated region
  $region2: #{ocfc_forward.1} parent=0 // pred_check
    _
  $region3: #{ocfc_forward.1} parent=0 // pred_check_branch
    %9 = sbr.rel (0) target = $region5
  $region4: #{ocfc_forward.1} parent=0 // pred_region
    _
  $region5: #{ocfc_forward.1} parent=0 // pred_fallthru
    _
  // Predicated region
  $region6: #{ocfc_forward.1} parent=0 // pred_check
    _
  $region7: #{ocfc_forward.1} parent=0 // pred_check_branch
    %11 = sbr.rel (0) target = $region9
  $region8: #{ocfc_forward.1} parent=0 // pred_region
    _
  $region9: #{ocfc_forward.1} parent=0 // pred_fallthru
    _
  // Predicated region
  $region10: #{ocfc_forward.1} parent=0 // pred_check
    _
  $region11: #{ocfc_forward.1} parent=0 // pred_check_branch
    %13 = sbr.rel (0) target = $region13
  $region12: #{ocfc_forward.1} parent=0 // pred_region
    _
  $region13: #{ocfc_forward.1} parent=0 // pred_fallthru
    _
  %v14 = vld [vmem:[%s0] sm:$0xff]
  %v15 = vld [vmem:[%s1] sm:$0xff]
  %v16 = vld [vmem:[%s1 + $0x8] sm:$0xff]
  %v17 = vld [vmem:[%s1 + $0x10] sm:$0xff]
  %v18 = vld [vmem:[%s1 + $0x18] sm:$0xff]
  %vm19 = vcmask 261120
  %v21 = vsel %vm19, %v14, 0
  %23 = vmatprep.subr.mxu0 0.0
  %24 = vmatpush1.msra.mxu0 %v15
  %25 = vmatprep.subr.mxu0 0.0
  %26 = vmatpush1.msra.mxu0 %v16
  %27 = vmatprep.subr.mxu0 0.0
  %28 = vmatpush1.msra.mxu0 %v17
  %29 = vmatprep.subr.mxu0 0.0
  %30 = vmatpush1.msra.mxu0 %v18
  %31 = vmatprep.subr.mxu0 0.0
  %32 = vmatpush1.msra.mxu0 0.0
  %33 = vmatprep.subr.mxu0 0.0
  %34 = vmatpush1.msra.mxu0 0.0
  %35 = vmatprep.subr.mxu0 0.0
  %36 = vmatpush1.msra.mxu0 0.0
  %37 = vmatprep.subr.mxu0 0.0
  %38 = vmatpush1.msra.mxu0 0.0
  %39 = vmatprep.subr.mxu0 0.0
  %40 = vmatpush1.msra.mxu0 0.0
  %41 = vmatprep.subr.mxu0 0.0
  %42 = vmatpush1.msra.mxu0 0.0
  %43 = vmatprep.subr.mxu0 0.0
  %44 = vmatpush1.msra.mxu0 0.0
  %45 = vmatprep.subr.mxu0 0.0
  %46 = vmatpush1.msra.mxu0 0.0
  %47 = vmatprep.subr.mxu0 0.0
  %48 = vmatpush1.msra.mxu0 0.0
  %49 = vmatprep.subr.mxu0 0.0
  %50 = vmatpush1.msra.mxu0 0.0
  %51 = vmatprep.subr.mxu0 0.0
  %52 = vmatpush1.msra.mxu0 0.0
  %53 = vmatprep.subr.mxu0 0.0
  %54 = vmatpush1.msra.mxu0 0.0
  %55 = vmatprep.subr.mxu0 0.0
  %56 = vmatpush1.msra.mxu0 0.0
  %57 = vmatprep.subr.mxu0 0.0
  %58 = vmatpush1.msra.mxu0 0.0
  %59 = vmatprep.subr.mxu0 0.0
  %60 = vmatpush1.msra.mxu0 0.0
  %61 = vmatprep.subr.mxu0 0.0
  %62 = vmatpush1.msra.mxu0 0.0
  %63 = vmatprep.subr.mxu0 0.0
  %64 = vmatpush1.msra.mxu0 0.0
  %65 = vmatprep.subr.mxu0 0.0
  %66 = vmatpush1.msra.mxu0 0.0
  %67 = vmatprep.subr.mxu0 0.0
  %68 = vmatpush1.msra.mxu0 0.0
  %69 = vmatprep.subr.mxu0 0.0
  %70 = vmatpush1.msra.mxu0 0.0
  %71 = vmatprep.subr.mxu0 0.0
  %72 = vmatpush1.msra.mxu0 0.0
  %73 = vmatprep.subr.mxu0 0.0
  %74 = vmatpush1.msra.mxu0 0.0
  %75 = vmatprep.subr.mxu0 0.0
  %76 = vmatpush1.msra.mxu0 0.0
  %77 = vmatprep.subr.mxu0 0.0
  %78 = vmatpush1.msra.mxu0 0.0
  %79 = vmatprep.subr.mxu0 0.0
  %80 = vmatpush1.msra.mxu0 0.0
  %81 = vmatprep.subr.mxu0 0.0
  %82 = vmatpush1.msra.mxu0 0.0
  %83 = vmatprep.subr.mxu0 0.0
  %84 = vmatpush1.msra.mxu0 0.0
  %85 = vmatprep.subr.mxu0 0.0
  %86 = vmatpush1.msra.mxu0 0.0
  %87 = vmatprep.mubr.f32.mxu0 0.0
  %88 = vmatmul.mubr.f32.gmra.mrb[0].mxu0 %v21
  %v89 = vpop.f32.mrb[0].mxu0
  %v90 = vadd.f32 0.0, %v89
  %v91 = vpop.f32.mrb[0].mxu0
  %92 = vdwg.mxu0
  %v93 = vxor.u32 %v90, 2147483648
  %v94 = vmul.f32 %v93, 1.442695
  %v95 = vpow.pop %v94
  %v96 = vadd.f32 %v95, 1.0
  %v97 = vrcp.pop %v96
  %v98 = vmul.f32 1.0, %v97
  %v99 = vld [vmem:[%s2] sm:$0xff]
  %v100 = vld [vmem:[%s2 + $0x8] sm:$0xff]
  %vm101 = vcmask 130048
  %v103 = vsel %vm101, %v98, 0
  %105 = vmatprep.subr.mxu0 0.0
  %106 = vmatpush1.msra.mxu0 %v99
  %107 = vmatprep.subr.mxu0 0.0
  %108 = vmatpush1.msra.mxu0 %v100
  %109 = vmatprep.subr.mxu0 0.0
  %110 = vmatpush1.msra.mxu0 0.0
  %111 = vmatprep.subr.mxu0 0.0
  %112 = vmatpush1.msra.mxu0 0.0
  %113 = vmatprep.subr.mxu0 0.0
  %114 = vmatpush1.msra.mxu0 0.0
  %115 = vmatprep.subr.mxu0 0.0
  %116 = vmatpush1.msra.mxu0 0.0
  %117 = vmatprep.subr.mxu0 0.0
  %118 = vmatpush1.msra.mxu0 0.0
  %119 = vmatprep.subr.mxu0 0.0
  %120 = vmatpush1.msra.mxu0 0.0
  %121 = vmatprep.subr.mxu0 0.0
  %122 = vmatpush1.msra.mxu0 0.0
  %123 = vmatprep.subr.mxu0 0.0
  %124 = vmatpush1.msra.mxu0 0.0
  %125 = vmatprep.subr.mxu0 0.0
  %126 = vmatpush1.msra.mxu0 0.0
  %127 = vmatprep.subr.mxu0 0.0
  %128 = vmatpush1.msra.mxu0 0.0
  %129 = vmatprep.subr.mxu0 0.0
  %130 = vmatpush1.msra.mxu0 0.0
  %131 = vmatprep.subr.mxu0 0.0
  %132 = vmatpush1.msra.mxu0 0.0
  %133 = vmatprep.subr.mxu0 0.0
  %134 = vmatpush1.msra.mxu0 0.0
  %135 = vmatprep.subr.mxu0 0.0
  %136 = vmatpush1.msra.mxu0 0.0
  %137 = vmatprep.subr.mxu0 0.0
  %138 = vmatpush1.msra.mxu0 0.0
  %139 = vmatprep.subr.mxu0 0.0
  %140 = vmatpush1.msra.mxu0 0.0
  %141 = vmatprep.subr.mxu0 0.0
  %142 = vmatpush1.msra.mxu0 0.0
  %143 = vmatprep.subr.mxu0 0.0
  %144 = vmatpush1.msra.mxu0 0.0
  %145 = vmatprep.subr.mxu0 0.0
  %146 = vmatpush1.msra.mxu0 0.0
  %147 = vmatprep.subr.mxu0 0.0
  %148 = vmatpush1.msra.mxu0 0.0
  %149 = vmatprep.subr.mxu0 0.0
  %150 = vmatpush1.msra.mxu0 0.0
  %151 = vmatprep.subr.mxu0 0.0
  %152 = vmatpush1.msra.mxu0 0.0
  %153 = vmatprep.subr.mxu0 0.0
  %154 = vmatpush1.msra.mxu0 0.0
  %155 = vmatprep.subr.mxu0 0.0
  %156 = vmatpush1.msra.mxu0 0.0
  %157 = vmatprep.subr.mxu0 0.0
  %158 = vmatpush1.msra.mxu0 0.0
  %159 = vmatprep.subr.mxu0 0.0
  %160 = vmatpush1.msra.mxu0 0.0
  %161 = vmatprep.subr.mxu0 0.0
  %162 = vmatpush1.msra.mxu0 0.0
  %163 = vmatprep.subr.mxu0 0.0
  %164 = vmatpush1.msra.mxu0 0.0
  %165 = vmatprep.subr.mxu0 0.0
  %166 = vmatpush1.msra.mxu0 0.0
  %167 = vmatprep.subr.mxu0 0.0
  %168 = vmatpush1.msra.mxu0 0.0
  %169 = vmatprep.mubr.f32.mxu0 0.0
  %170 = vmatmul.mubr.f32.gmra.mrb[0].mxu0 %v103
  %v171 = vpop.f32.mrb[0].mxu0
  %v172 = vadd.f32 0.0, %v171
  %v173 = vpop.f32.mrb[0].mxu0
  %174 = vdwg.mxu0
  %vm175 = vcmask 31744
  %176 = vst.msk [vmem:[%s3] sm:$0xff] %vm175, %v172
  // Predicated region
  $region14: #{ocfc_forward.1} parent=0 // pred_check
    _
  $region15: #{ocfc_forward.1} parent=0 // pred_check_branch
    %178 = sbr.rel (0) target = $region17
  $region16: #{ocfc_forward.1} parent=0 // pred_region
    _
  $region17: #{ocfc_forward.1} parent=0 // pred_fallthru
    _
  // Predicated region
  $region18: #{ocfc_forward.1} parent=0 // pred_check
    _
  $region19: #{ocfc_forward.1} parent=0 // pred_check_branch
    %180 = sbr.rel (0) target = $region21
  $region20: #{ocfc_forward.1} parent=0 // pred_region
    _
  $region21: #{ocfc_forward.1} parent=0 // pred_fallthru
    _

</llo_original>
